<compile_context>
chip_gen: v7x
topology: tpu7x:2x2x1
jax: 0.10.0
libtpu: 0.0.40
codegen_flags: <defaults>
</compile_context>

<pallas_src>
import functools
import math

import jax
import jax.numpy as jnp
from jax.experimental import pallas as pl
from jax.experimental.pallas import tpu as pltpu


def _round_up(x, m):
    return (x + m - 1) // m * m


def _sublane_align(itemsize):
    # Minimum sublane packing for the second-to-last dim: f32 -> 8, bf16 -> 16, int8/fp8 -> 32.
    return max(8, 32 // max(itemsize, 1))


def _vmem_budget():
    """(block_cap_bytes, vmem_limit_bytes) derived from this generation's VMEM size."""
    try:
        vmem_bytes = pltpu.get_tpu_info().vmem_capacity_bytes
    except Exception:
        vmem_bytes = 64 << 20  # conservative fallback (v7x-sized)
    # ~4 live block buffers (input x2 double-buffer + output x2) plus weight/slack.
    pipeline_budget = min(vmem_bytes // 2, 48 << 20)   # v7x: 32 MiB, v5e/v6e: 48 MiB
    block_cap = min(pipeline_budget // 4, 8 << 20)
    vmem_limit = min(vmem_bytes, pipeline_budget + (8 << 20))
    return block_cap, vmem_limit


def _pick_row_tile(nrows, row_bytes, align, block_cap_bytes):
    """Largest row tile (multiple of `align`) fitting in block_cap_bytes, keeping the
    grid >= 2 blocks when there is enough work (so v7x's two TensorCores both run)."""
    cap_rows = max(1, block_cap_bytes // max(row_bytes, 1))
    t = min(nrows, cap_rows)
    if nrows > align:
        t = min(t, _round_up(pl.cdiv(nrows, 2), align))
    t = max(align, (t // align) * align)
    return t


def _rmsnorm_last_kernel(x_ref, g_ref, o_ref, *, eps):
    # x_ref: (TM, D) -- normalized axis is last (lanes). One dense load/store per block.
    x = x_ref[...].astype(jnp.float32)
    ms = jnp.mean(x * x, axis=-1, keepdims=True) + eps
    o_ref[...] = (g_ref[...] * x * jax.lax.rsqrt(ms)).astype(o_ref.dtype)


def _rmsnorm_mid_kernel(x_ref, g_ref, o_ref, *, eps):
    # x_ref: (TB, D, inner) -- normalized axis is the middle (sublane) axis; the fused
    # trailing spatial dims stay dense on lanes.  No transposes.
    x = x_ref[...].astype(jnp.float32)
    ms = jnp.mean(x * x, axis=-2, keepdims=True) + eps
    o_ref[...] = (g_ref[...] * x * jax.lax.rsqrt(ms)).astype(o_ref.dtype)


def rmsnorm_reference(x, weight, eps=1e-8, apply_to_dim_idx=-1):
    """Plain-JAX mirror of the PyTorch forward (also the large-row fallback)."""
    xf = x.astype(jnp.float32)
    variance = jnp.mean(xf * xf, axis=apply_to_dim_idx, keepdims=True) + eps
    n_trailing = (x.ndim - apply_to_dim_idx) if apply_to_dim_idx >= 0 else (-apply_to_dim_idx - 1)
    w = weight.astype(jnp.float32).reshape(weight.shape + (1,) * n_trailing)
    return (w * xf / jnp.sqrt(variance)).astype(x.dtype)


def rmsnorm(x, weight, *, eps=1e-8, apply_to_dim_idx=-1):
    """Pallas implementation of RMSNorm.forward."""
    # TODO(synk): the PyTorch module's non-negative apply_to_dim_idx path uses an
    # unusual weight broadcast; only the (default) negative-index convention is handled.
    assert apply_to_dim_idx < 0, "only negative apply_to_dim_idx is supported"
    axis = x.ndim + apply_to_dim_idx
    D = x.shape[axis]
    assert weight.shape == (D,), (weight.shape, D)

    outer = math.prod(x.shape[:axis])
    inner = math.prod(x.shape[axis + 1:])

    orig_shape, orig_dtype = x.shape, x.dtype
    itemsize = jnp.dtype(orig_dtype).itemsize
    g = weight.astype(jnp.float32)

    block_cap, vmem_limit = _vmem_budget()
    cparams = pltpu.CompilerParams(
        dimension_semantics=("parallel",), vmem_limit_bytes=vmem_limit)

    if inner == 1:
        # Normalized axis is last: flatten (free reshape) to (rows, D); D lives on lanes.
        align = _sublane_align(itemsize)
        row_bytes = _round_up(D, 128) * itemsize  # padded lane footprint of one row
        if align * row_bytes > block_cap:
            # TODO(synk): huge-D rows exceed the VMEM block budget; split D over a second
            # "arbitrary" grid axis with a running sum-of-squares accumulator instead.
            return rmsnorm_reference(x, weight, eps, apply_to_dim_idx)
        tm = _pick_row_tile(outer, row_bytes, align, block_cap)
        x2 = x.reshape(outer, D)
        out = pl.pallas_call(
            functools.partial(_rmsnorm_last_kernel, eps=eps),
            out_shape=jax.ShapeDtypeStruct((outer, D), orig_dtype),
            grid_spec=pltpu.PrefetchScalarGridSpec(
                num_scalar_prefetch=0,
                grid=(pl.cdiv(outer, tm),),
                in_specs=[
                    pl.BlockSpec((tm, D), lambda i: (i, 0)),
                    pl.BlockSpec((1, D), lambda i: (0, 0)),
                ],
                out_specs=pl.BlockSpec((tm, D), lambda i: (i, 0)),
            ),
            compiler_params=cparams,
        )(x2, g.reshape(1, D))
        return out.reshape(orig_shape)

    # Normalized axis is interior (e.g. channels of NCHW): keep the trailing dims fused
    # on lanes -> (outer, D, inner), reduce over the middle (sublane) axis.
    sub_align = _sublane_align(itemsize)
    row_bytes = _round_up(D, sub_align) * _round_up(inner, 128) * itemsize
    if row_bytes > block_cap:
        # TODO(synk): a single (D, inner) slab exceeds the VMEM block budget; would need
        # to tile the fused spatial (lane) axis as a second grid dimension.
        return rmsnorm_reference(x, weight, eps, apply_to_dim_idx)
    tb = _pick_row_tile(outer, row_bytes, 1, block_cap)
    x3 = x.reshape(outer, D, inner)
    out = pl.pallas_call(
        functools.partial(_rmsnorm_mid_kernel, eps=eps),
        out_shape=jax.ShapeDtypeStruct((outer, D, inner), orig_dtype),
        grid_spec=pltpu.PrefetchScalarGridSpec(
            num_scalar_prefetch=0,
            grid=(pl.cdiv(outer, tb),),
            in_specs=[
                pl.BlockSpec((tb, D, inner), lambda i: (i, 0, 0)),
                pl.BlockSpec((1, D, 1), lambda i: (0, 0, 0)),
            ],
            out_specs=pl.BlockSpec((tb, D, inner), lambda i: (i, 0, 0)),
        ),
        compiler_params=cparams,
    )(x3, g.reshape(1, D, 1))
    return out.reshape(orig_shape)


if __name__ == "__main__":
    key = jax.random.PRNGKey(0)
    k1, k2, k3, k4, k5 = jax.random.split(key, 5)

    # Case 1: default apply_to_dim_idx=-1 — normalize the hidden dim of (B, S, H).
    x1 = jax.random.normal(k1, (2, 8, 32), jnp.float32)
    g1 = 1.0 + 0.1 * jax.random.normal(k2, (32,), jnp.float32)
    y1 = jax.block_until_ready(rmsnorm(x1, g1, eps=1e-8, apply_to_dim_idx=-1))
    r1 = rmsnorm_reference(x1, g1, 1e-8, -1)
    err1 = float(jnp.max(jnp.abs(y1 - r1)))

    # Case 2: apply_to_dim_idx=-3 — normalize the channel dim of an NCHW tensor
    # (how the CA4 model applies RMSNorm inside its conv blocks).
    x2 = jax.random.normal(k3, (2, 4, 16, 16), jnp.float32)
    g2 = 1.0 + 0.1 * jax.random.normal(k4, (4,), jnp.float32)
    y2 = jax.block_until_ready(rmsnorm(x2, g2, eps=1e-8, apply_to_dim_idx=-3))
    r2 = rmsnorm_reference(x2, g2, 1e-8, -3)
    err2 = float(jnp.max(jnp.abs(y2 - r2)))

    # Case 3: ragged grid — outer (=15 rows) is not a multiple of the row tile, so the
    # last block is masked rather than padded/sliced on the host.
    x3 = jax.random.normal(k5, (3, 5, 32), jnp.float32)
    y3 = jax.block_until_ready(rmsnorm(x3, g1, eps=1e-8, apply_to_dim_idx=-1))
    r3 = rmsnorm_reference(x3, g1, 1e-8, -1)
    err3 = float(jnp.max(jnp.abs(y3 - r3)))

    assert y1.shape == x1.shape, y1.shape
    assert y2.shape == x2.shape, y2.shape
    assert y3.shape == x3.shape, y3.shape
    if max(err1, err2, err3) > 1e-4:
        raise AssertionError(
            f"Pallas RMSNorm mismatch vs reference: err1={err1} err2={err2} err3={err3}")

    print("KERNEL_OK")
</pallas_src>

<mosaic_0001>
module attributes {stable_mosaic.version = 11 : i64} {
  func.func @_rmsnorm_last_kernel(%arg0: i32, %arg1: memref<8x32xf32, #tpu.memory_space<vmem>>, %arg2: memref<1x32xf32, #tpu.memory_space<vmem>>, %arg3: memref<8x32xf32, #tpu.memory_space<vmem>>) attributes {dimension_semantics = [#tpu.dimension_semantics<parallel>], iteration_bounds = array<i64: 2>, scalar_prefetch = 0 : i64, scratch_operands = 0 : i64, tpu.core_type = #tpu.core_type<tc>, window_params = [{transform_indices = @transform_0, window_bounds = array<i64: 8, 32>}, {pipeline_mode = #tpu.pipeline_mode<synchronous>, transform_indices = @transform_1, window_bounds = array<i64: 1, 32>}, {transform_indices = @transform_2, window_bounds = array<i64: 8, 32>}]} {
    %c0 = arith.constant 0 : index
    %c0_0 = arith.constant 0 : index
    %0 = vector.load %arg1[%c0, %c0_0] : memref<8x32xf32, #tpu.memory_space<vmem>>, vector<8x32xf32>
    %1 = arith.mulf %0, %0 : vector<8x32xf32>
    %cst = arith.constant dense<0.000000e+00> : vector<8xf32>
    %2 = vector.multi_reduction <add>, %1, %cst [1] : vector<8x32xf32> to vector<8xf32>
    %3 = vector.shape_cast %2 : vector<8xf32> to vector<8x1xf32>
    %cst_1 = arith.constant 3.200000e+01 : f32
    %4 = vector.broadcast %cst_1 : f32 to vector<8x1xf32>
    %5 = arith.divf %3, %4 : vector<8x1xf32>
    %cst_2 = arith.constant 9.99999993E-9 : f32
    %6 = vector.broadcast %cst_2 : f32 to vector<8x1xf32>
    %7 = arith.addf %5, %6 : vector<8x1xf32>
    %c0_3 = arith.constant 0 : index
    %c0_4 = arith.constant 0 : index
    %8 = vector.load %arg2[%c0_3, %c0_4] : memref<1x32xf32, #tpu.memory_space<vmem>>, vector<1x32xf32>
    %9 = vector.broadcast %8 : vector<1x32xf32> to vector<8x32xf32>
    %10 = arith.mulf %9, %0 : vector<8x32xf32>
    %11 = math.rsqrt %7 : vector<8x1xf32>
    %12 = vector.broadcast %11 : vector<8x1xf32> to vector<8x32xf32>
    %13 = arith.mulf %10, %12 : vector<8x32xf32>
    %c0_5 = arith.constant 0 : index
    %c0_6 = arith.constant 0 : index
    %14 = vector.load %arg3[%c0_5, %c0_6] : memref<8x32xf32, #tpu.memory_space<vmem>>, vector<8x32xf32>
    tpu.vector_store %arg3[%c0_5, %c0_6], %13 {strides = array<i32>} : memref<8x32xf32, #tpu.memory_space<vmem>>, vector<8x32xf32>,
    return
  }
  func.func @transform_0(%arg0: i32) -> (i32, i32) {
    %c0_i32 = arith.constant 0 : i32
    %c0_i32_0 = arith.constant 0 : i32
    return %arg0, %c0_i32 : i32, i32
  }
  func.func @transform_1(%arg0: i32) -> (i32, i32) {
    %c0_i32 = arith.constant 0 : i32
    %c0_i32_0 = arith.constant 0 : i32
    %c0_i32_1 = arith.constant 0 : i32
    return %c0_i32, %c0_i32_0 : i32, i32
  }
  func.func @transform_2(%arg0: i32) -> (i32, i32) {
    %c0_i32 = arith.constant 0 : i32
    %c0_i32_0 = arith.constant 0 : i32
    return %arg0, %c0_i32 : i32, i32
  }
}

</mosaic_0001>

<llo_original>
// kernel: tpu_custom_call.1
$region0: #{tpu_custom_call.1}
  #allocation0 [shape = 'u32[]', space=smem, size = 0x4, offset = 0x4, fixed_abs, tag = 'smem constant byte address 0x4 - core index']
  #allocation1 [shape = 'u32[144,128]{1,0:T(1,128)}', space=vmem, size = 0x12000, scoped, tag = 'internal scratch']
  %s0 = inlined_call_operand.hbm [shape: f32[16,32], index: 0, kind: input, shape index: {}]
  %s1 = inlined_call_operand.vmem [shape: f32[1,32], index: 1, kind: input, shape index: {}]
  %s2 = inlined_call_operand.hbm [shape: f32[16,32], index: 2, kind: output, shape index: {}]
  %s3 = sld [smem:[#allocation0]]
  $region45: #{tpu_custom_call.1} parent=0
    _
  %s5 = ssub.s32 1, %s3
  %s6 = scalar_select 0, %s5, %s3
  $region1: #{tpu_custom_call.1} parent=0
    #allocation2 [shape = 'u8[8192]{0}', space=vmem, size = 0x2000, scoped, tag = 'input window, operand 0']
    #allocation3 [shape = 's32[2]{0}', space=sflag, size = 0x8, scoped, tag = 'scoped memory for tpu_custom_call.1']
    #allocation4 [shape = 's32[2]{0}', space=sflag, size = 0x8, scoped, tag = 'scoped memory for tpu_custom_call.1']
    #allocation5 [shape = 'u8[8192]{0}', space=vmem, size = 0x2000, scoped, tag = 'output window, operand 0']
    %7 = vsyncpa [#allocation3], 0
    %s8 = scalar_lea.sflag [#allocation3], 1
    %9 = vsyncpa %s8, 0
    %10 = vsyncpa [#allocation4], 0
    %s11 = scalar_lea.sflag [#allocation4], 1
    %12 = vsyncpa %s11, 0
    loop: start=0, step=1, limit=4
    $region2: #{tpu_custom_call.1} parent=1 // loop_pre_header
      _
    $region3: #{tpu_custom_call.1} parent=1 // loop_header
      %s14 = sphi 0, %s18
      %p15 = scmp.ge.s32.totalorder %s14, 4
      %s24 = sphi 0, %s26
      %s27 = sphi 0, %s24
      %s28 = sphi 0, %s27
      %s44 = sphi 0, %s28
      %s48 = sphi 0, %s48
      %s50 = sphi 0, %s48
      %s51 = sphi 0, %s50
      %s65 = sphi 0, %s51
      %s71 = sphi 0, %s73
      %s74 = sphi 0, %s71
      %s75 = sphi 0, %s74
      %s91 = sphi 0, %s75
    $region4: #{tpu_custom_call.1} parent=1 // loop_header_branch
      %17 = sbr.rel (%p15) target = $region8
    $region5: #{tpu_custom_call.1} parent=1 // loop_body
      %s19 = ssub.s32 %s14, 1
      %s20 = ssub.s32 %s14, 2
      %s21 = sadd.s32 %s14, 1
      %s22 = ssub.s32 %s14, %s21
      %p23 = scmp.eq.s32.totalorder %s22, 0
      %s25 = sadd.s32 %s24, 1
      %s26 = scalar_select %p23, %s24, %s25
      %p29 = pneg %p23
      %p30 = scmp.eq.s32.totalorder %s14, 1
      %p31 = por %p29, %p30
      %p32 = scmp.ne.s32.totalorder %s24, %s27
      %p33 = scmp.eq.s32.totalorder %s14, 0
      %p34 = por %p32, %p33
      %p35 = scmp.ne.s32.totalorder %s24, %s27
      %p36 = scmp.eq.s32.totalorder %s19, 1
      %p37 = por %p35, %p36
      %p38 = scmp.ne.s32.totalorder %s27, %s28
      %p39 = scmp.eq.s32.totalorder %s19, 0
      %p40 = por %p38, %p39
      %p41 = scmp.ne.s32.totalorder %s27, %s28
      %p42 = scmp.eq.s32.totalorder %s20, 1
      %p43 = por %p41, %p42
      %p45 = scmp.ne.s32.totalorder %s28, %s44
      %p46 = scmp.eq.s32.totalorder %s20, 0
      %p47 = por %p45, %p46
      %s49 = sadd.s32 %s48, 1
      %p52 = scmp.eq.s32.totalorder %s14, 1
      %p53 = scmp.ne.s32.totalorder %s48, %s50
      %p54 = scmp.eq.s32.totalorder %s14, 0
      %p55 = por %p53, %p54
      %p56 = scmp.ne.s32.totalorder %s48, %s50
      %p57 = scmp.eq.s32.totalorder %s19, 1
      %p58 = por %p56, %p57
      %p59 = scmp.ne.s32.totalorder %s50, %s51
      %p60 = scmp.eq.s32.totalorder %s19, 0
      %p61 = por %p59, %p60
      %p62 = scmp.ne.s32.totalorder %s50, %s51
      %p63 = scmp.eq.s32.totalorder %s20, 1
      %p64 = por %p62, %p63
      %p66 = scmp.ne.s32.totalorder %s51, %s65
      %p67 = scmp.eq.s32.totalorder %s20, 0
      %p68 = por %p66, %p67
      %s69 = ssub.s32 %s14, %s21
      %p70 = scmp.eq.s32.totalorder %s69, 0
      %s72 = sadd.s32 %s71, 1
      %s73 = scalar_select %p70, %s71, %s72
      %p76 = pneg %p70
      %p77 = scmp.eq.s32.totalorder %s14, 1
      %p78 = por %p76, %p77
      %p79 = scmp.ne.s32.totalorder %s71, %s74
      %p80 = scmp.eq.s32.totalorder %s14, 0
      %p81 = por %p79, %p80
      %p82 = scmp.ne.s32.totalorder %s71, %s74
      %p83 = scmp.eq.s32.totalorder %s19, 1
      %p84 = por %p82, %p83
      %p85 = scmp.ne.s32.totalorder %s74, %s75
      %p86 = scmp.eq.s32.totalorder %s19, 0
      %p87 = por %p85, %p86
      %p88 = scmp.ne.s32.totalorder %s74, %s75
      %p89 = scmp.eq.s32.totalorder %s20, 1
      %p90 = por %p88, %p89
      %p92 = scmp.ne.s32.totalorder %s75, %s91
      %p93 = scmp.eq.s32.totalorder %s20, 0
      %p94 = por %p92, %p93
      %p95 = scmp.le.s32.totalorder 1, %s14
      %p96 = scmp.lt.s32.totalorder %s14, 3
      %p97 = pnand %p95, %p96
      %p98 = pneg %p97
      // Predicated region
      $region9: #{tpu_custom_call.1} parent=5 // pred_check
        _
      $region10: #{tpu_custom_call.1} parent=5 // pred_check_branch
        %100 = sbr.rel (%p97) target = $region12
      $region11: #{tpu_custom_call.1} parent=5 // pred_region
        %s101 = ssub.s32 %s14, 1
        // Predicated region
        $region13: #{tpu_custom_call.1} parent=11 // pred_check
          %p102 = pneg %p61
        $region14: #{tpu_custom_call.1} parent=11 // pred_check_branch
          %104 = sbr.rel (%p102) target = $region16
        $region15: #{tpu_custom_call.1} parent=11 // pred_region
          _
        $region16: #{tpu_custom_call.1} parent=11 // pred_fallthru
          _
      $region12: #{tpu_custom_call.1} parent=5 // pred_fallthru
        _
      %p105 = scmp.lt.s32.totalorder %s14, 2
      // Predicated region
      $region17: #{tpu_custom_call.1} parent=5 // pred_check
        %p106 = pneg %p105
      $region18: #{tpu_custom_call.1} parent=5 // pred_check_branch
        %108 = sbr.rel (%p106) target = $region20
      $region19: #{tpu_custom_call.1} parent=5 // pred_region
        // Predicated region
        $region21: #{tpu_custom_call.1} parent=19 // pred_check
          %p109 = pneg %p34
        $region22: #{tpu_custom_call.1} parent=19 // pred_check_branch
          %111 = sbr.rel (%p109) target = $region24
        $region23: #{tpu_custom_call.1} parent=19 // pred_region
          %s112 = sand.u32 %s24, 1
          %s113 = scalar_lea.sflag [#allocation3], %s112
          %s114 = sand.u32 %s24, 1
          %s115 = smul.addr %s114, 8
          %s116 = scalar_lea.vmem [#allocation2], %s115
          %s118 = ssub.s32 128, 128
          %119 = vsyncadd %s113, %s118
          %s120 = smul.addr %s14, 128
          %s121 = scalar_lea.hbm %s0, %s120
          %s123 = sshll.u32 %s116, 4
          %s124 = int_to_ptr.vmem [resolvable:$true] %s123
          %126 = dma.hbm_to_vmem [thread:$0]  %s121, 128, %s124, %s113
        $region24: #{tpu_custom_call.1} parent=19 // pred_fallthru
          _
      $region20: #{tpu_custom_call.1} parent=5 // pred_fallthru
        _
      %p127 = scmp.le.s32.totalorder 1, %s14
      %p128 = scmp.lt.s32.totalorder %s14, 3
      %p129 = pnand %p127, %p128
      %p130 = pneg %p129
      // Predicated region
      $region25: #{tpu_custom_call.1} parent=5 // pred_check
        _
      $region26: #{tpu_custom_call.1} parent=5 // pred_check_branch
        %132 = sbr.rel (%p129) target = $region28
      $region27: #{tpu_custom_call.1} parent=5 // pred_region
        %s133 = ssub.s32 %s14, 1
        %s134 = sand.u32 %s27, 1
        %s135 = scalar_lea.sflag [#allocation3], %s134
        %s136 = sand.u32 %s27, 1
        %s137 = smul.addr %s136, 8
        %s138 = scalar_lea.vmem [#allocation2], %s137
        // Predicated region
        $region29: #{tpu_custom_call.1} parent=27 // pred_check
          %p139 = pneg %p40
        $region30: #{tpu_custom_call.1} parent=27 // pred_check_branch
          %141 = sbr.rel (%p139) target = $region32
        $region31: #{tpu_custom_call.1} parent=27 // pred_region
          %142 = dma.done %s135, 128
        $region32: #{tpu_custom_call.1} parent=27 // pred_fallthru
          _
        %s143 = sand.u32 %s27, 1
        %s144 = scalar_lea.sflag [#allocation3], %s143
        %s145 = sand.u32 %s27, 1
        %s146 = smul.addr %s145, 8
        %s147 = scalar_lea.vmem [#allocation2], %s146
        %p148 = pneg %p40
        %p149 = pneg %p37
        %p150 = pneg %p61
        %p151 = pneg %p58
        %p152 = pneg %p87
        %p153 = pneg %p84
        %s154 = sand.u32 %s74, 1
        %s155 = scalar_lea.sflag [#allocation4], %s154
        %s156 = sand.u32 %s74, 1
        %s157 = smul.addr %s156, 8
        %s158 = scalar_lea.vmem [#allocation5], %s157
        %v159 = vld [vmem:[%s138] sm:$0xff]
        %v160 = vmul.f32 %v159, %v159
        %vm161 = vcmask 261120
        %v162 = vsel %vm161, %v160, 0.0
        %163 = vadd.xlane.f32.xlu0 %v162
        %v164 = vpop.xlane.xlu0 %163
        %v165 = vrcp.pop 32.0
        %v166 = vmul.f32 %v164, %v165
        %v167 = vadd.f32 %v166, 1e-08
        %v168 = vld [vmem:[%s1] sm:$0x1]
        %v170 = vlaneseq
        %v171 = vshrl.u32 %v170, 7
        %v172 = vsub.s32 0, %v171
        %v173 = vrot.slane %v168, %v172
        %v175 = vmul.f32 %v173, %v159
        %v176 = vrsqrt.pop %v167
        %v177 = vmul.f32 %v175, %v176
        %178 = vst.msk [vmem:[%s158] sm:$0xff] %vm161, %v177
        %s179 = sand.u32 %s74, 1
        %s180 = scalar_lea.sflag [#allocation4], %s179
        %s181 = sand.u32 %s74, 1
        %s182 = smul.addr %s181, 8
        %s183 = scalar_lea.vmem [#allocation5], %s182
        // Predicated region
        $region33: #{tpu_custom_call.1} parent=27 // pred_check
          %p184 = pneg %p84
        $region34: #{tpu_custom_call.1} parent=27 // pred_check_branch
          %186 = sbr.rel (%p184) target = $region36
        $region35: #{tpu_custom_call.1} parent=27 // pred_region
          %s188 = ssub.s32 128, 128
          %189 = vsyncadd %s180, %s188
          %s190 = smul.addr %s19, 128
          %s191 = scalar_lea.hbm %s2, %s190
          %s193 = sshll.u32 %s183, 4
          %s194 = int_to_ptr.vmem [resolvable:$true] %s193
          %196 = dma.vmem_to_hbm [thread:$0]  %s194, 128, %s191, %s180
        $region36: #{tpu_custom_call.1} parent=27 // pred_fallthru
          _
      $region28: #{tpu_custom_call.1} parent=5 // pred_fallthru
        _
      %p197 = scmp.le.s32.totalorder 2, %s14
      // Predicated region
      $region37: #{tpu_custom_call.1} parent=5 // pred_check
        %p198 = pneg %p197
      $region38: #{tpu_custom_call.1} parent=5 // pred_check_branch
        %200 = sbr.rel (%p198) target = $region40
      $region39: #{tpu_custom_call.1} parent=5 // pred_region
        %s201 = ssub.s32 %s14, 2
        // Predicated region
        $region41: #{tpu_custom_call.1} parent=39 // pred_check
          %p202 = pneg %p90
        $region42: #{tpu_custom_call.1} parent=39 // pred_check_branch
          %204 = sbr.rel (%p202) target = $region44
        $region43: #{tpu_custom_call.1} parent=39 // pred_region
          %s205 = sand.u32 %s75, 1
          %s206 = scalar_lea.sflag [#allocation4], %s205
          %s207 = sand.u32 %s75, 1
          %s208 = smul.addr %s207, 8
          %s209 = scalar_lea.vmem [#allocation5], %s208
          %210 = dma.done %s206, 128
        $region44: #{tpu_custom_call.1} parent=39 // pred_fallthru
          _
      $region40: #{tpu_custom_call.1} parent=5 // pred_fallthru
        _
    $region6: #{tpu_custom_call.1} parent=1 // loop_footer
      %s18 = sadd.s32 1, %s14
    $region7: #{tpu_custom_call.1} parent=1 // loop_footer_branch
      %13 = sbr.rel target = $region3
    $region8: #{tpu_custom_call.1} parent=1 // loop_exit
      _
    %211 = vsyncpa [#allocation3], 1
    %s212 = scalar_lea.sflag [#allocation3], 1
    %213 = vsyncpa %s212, 1
    %214 = vsyncpa [#allocation4], 1
    %s215 = scalar_lea.sflag [#allocation4], 1
    %216 = vsyncpa %s215, 1

</llo_original>
